<compile_context>
chip_gen: v5e
topology: v5e:2x2
jax: 0.10.0
libtpu: 0.0.40
codegen_flags: <defaults>
</compile_context>

<pallas_src>
import functools

import jax
import jax.numpy as jnp
from jax.experimental import pallas as pl
from jax.experimental.pallas import tpu as pltpu

_LANES = 128
_MAX_BLOCK_ROWS = 8192  # (8192, 128) f32 = 4 MiB per input block


def _round_up(x, m):
    return ((x + m - 1) // m) * m


def _sublane_mult(dt):
    # 4-byte -> 8 rows, 2-byte -> 16, 1-byte -> 32 (sub-32-bit packs sublanes).
    return 8 * max(1, 4 // jnp.dtype(dt).itemsize)


def _dice_partials_kernel(p_ref, t_ref, inter_ref, union_ref, *,
                          valid_rows_last):
    """Accumulate sigmoid(p)*t and sigmoid(p)+t into resident (1,128) rows."""
    i = pl.program_id(0)

    @pl.when(i == 0)
    def _init():
        inter_ref[...] = jnp.zeros_like(inter_ref)
        union_ref[...] = jnp.zeros_like(union_ref)

    p = jax.nn.sigmoid(p_ref[...].astype(jnp.float32))
    t = t_ref[...].astype(jnp.float32)
    pt = p * t      # intersection contribution
    u = p + t       # union contribution (psum + tsum folded together)

    def _accumulate(pt_v, u_v):
        inter_ref[...] += jnp.sum(pt_v, axis=0, keepdims=True)
        union_ref[...] += jnp.sum(u_v, axis=0, keepdims=True)

    if valid_rows_last is None:
        # Every block is fully valid (lane tail is value-padded to contribute 0).
        _accumulate(pt, u)
    else:
        last = pl.num_programs(0) - 1

        @pl.when(i != last)
        def _full():
            _accumulate(pt, u)

        @pl.when(i == last)
        def _masked():
            # Only the last (partial) block can contain unspecified rows.
            row = jax.lax.broadcasted_iota(jnp.int32, pt.shape, 0)
            valid = row < valid_rows_last  # static trace-time constant
            _accumulate(jnp.where(valid, pt, 0.0), jnp.where(valid, u, 0.0))


def dice_loss(preds, targets, smooth=1e-05):
    """Pallas TPU implementation of DiceLoss.forward.

    preds, targets: arrays of identical shape (e.g. NCHW), any float dtype.
    Returns a scalar float32 loss.
    """
    assert preds.shape == targets.shape

    if not jnp.issubdtype(preds.dtype, jnp.floating):
        preds = preds.astype(jnp.float32)

    n = preds.size
    p_flat = preds.reshape(-1)
    t_flat = targets.reshape(-1)

    # Only pad if the flat size isn't lane-aligned (pad < 128 elements; common
    # NCHW sizes need no copy at all).  preds tail -> most-negative finite
    # (sigmoid -> 0), targets tail -> 0, so padding contributes exactly zero
    # to both sums and never needs an in-kernel mask.
    rem = n % _LANES
    if rem != 0:
        pad = _LANES - rem
        p_flat = jnp.pad(p_flat, (0, pad),
                         constant_values=float(jnp.finfo(p_flat.dtype).min))
        t_flat = jnp.pad(t_flat, (0, pad), constant_values=0)

    rows = p_flat.size // _LANES

    # dtype-aware sublane rounding (max packing over the two input dtypes).
    mult = max(_sublane_mult(p_flat.dtype), _sublane_mult(t_flat.dtype))
    block_rows = min(_MAX_BLOCK_ROWS, _round_up(rows, mult))
    grid = pl.cdiv(rows, block_rows)

    # Valid rows of the last block; None => last block is full (no mask path).
    tail_rows = rows - (grid - 1) * block_rows
    valid_rows_last = None if tail_rows == block_rows else tail_rows

    p2d = p_flat.reshape(rows, _LANES)
    t2d = t_flat.reshape(rows, _LANES)

    # Explicit VMEM budget: double-buffered input blocks + headroom.  For the
    # largest case (two f32 inputs at 8192 rows) this is 16 MiB + 4 MiB,
    # comfortably under v5e/v6e (128 MiB) and v7x (64 MiB) physical VMEM.
    in_bytes = sum(2 * block_rows * _LANES * jnp.dtype(a.dtype).itemsize
                   for a in (p2d, t2d))
    vmem_limit = int(min(in_bytes + (4 << 20), 64 << 20))

    kernel = functools.partial(_dice_partials_kernel,
                               valid_rows_last=valid_rows_last)

    inter_row, union_row = pl.pallas_call(
        kernel,
        out_shape=(
            jax.ShapeDtypeStruct((1, _LANES), jnp.float32),
            jax.ShapeDtypeStruct((1, _LANES), jnp.float32),
        ),
        grid_spec=pltpu.PrefetchScalarGridSpec(
            num_scalar_prefetch=0,
            grid=(grid,),
            in_specs=[
                pl.BlockSpec((block_rows, _LANES), lambda i: (i, 0)),
                pl.BlockSpec((block_rows, _LANES), lambda i: (i, 0)),
            ],
            out_specs=[
                # Constant block index -> outputs stay resident in VMEM across
                # the whole grid (accumulator pattern), written back once.
                pl.BlockSpec((1, _LANES), lambda i: (0, 0)),
                pl.BlockSpec((1, _LANES), lambda i: (0, 0)),
            ],
        ),
        compiler_params=pltpu.CompilerParams(
            dimension_semantics=("arbitrary",),  # sequential: resident accumulator
            vmem_limit_bytes=vmem_limit,
        ),
    )(p2d, t2d)

    # Trivial 128-lane final reduction + dice math in plain JAX.
    intersection = jnp.sum(inter_row)
    union = jnp.sum(union_row)
    dice = (2.0 * intersection + smooth) / (union + smooth)
    return (1.0 - dice).astype(jnp.float32)


def _dice_loss_ref(preds, targets, smooth=1e-05):
    p = jax.nn.sigmoid(preds.astype(jnp.float32))
    t = targets.astype(jnp.float32)
    intersection = jnp.sum(p * t)
    union = jnp.sum(p) + jnp.sum(t)
    dice = (2.0 * intersection + smooth) / (union + smooth)
    return 1.0 - dice


if __name__ == "__main__":
    key = jax.random.PRNGKey(0)
    k1, k2, k3, k4, k5, k6 = jax.random.split(key, 6)

    # Test 1: NCHW UNet-style logits / binary masks (lane-aligned size ->
    # no padding, no masking path, single block).
    preds = jax.random.normal(k1, (2, 4, 16, 16), dtype=jnp.float32)
    targets = (jax.random.uniform(k2, (2, 4, 16, 16)) > 0.5).astype(jnp.float32)
    loss = jax.block_until_ready(dice_loss(preds, targets))
    ref = _dice_loss_ref(preds, targets)
    assert jnp.allclose(loss, ref, atol=1e-5, rtol=1e-5), (loss, ref)

    # Test 2: odd shape (not a multiple of 128) + bf16 logits -> exercises the
    # value-padded lane tail, the last-block row mask, and the bf16 path with
    # 16-row sublane rounding.
    preds2 = jax.random.normal(k3, (3, 5, 7, 11), dtype=jnp.float32).astype(jnp.bfloat16)
    targets2 = (jax.random.uniform(k4, (3, 5, 7, 11)) > 0.5).astype(jnp.float32)
    loss2 = jax.block_until_ready(dice_loss(preds2, targets2))
    ref2 = _dice_loss_ref(preds2, targets2)
    assert jnp.allclose(loss2, ref2, atol=1e-5, rtol=1e-5), (loss2, ref2)

    # Test 3: large enough for a multi-step grid with a partial last block ->
    # exercises the resident-accumulator init/accumulate path and the
    # pl.when-gated row mask across multiple grid steps.
    preds3 = jax.random.normal(k5, (2, 1, 1024, 515), dtype=jnp.float32)
    targets3 = (jax.random.uniform(k6, (2, 1, 1024, 515)) > 0.5).astype(jnp.float32)
    loss3 = jax.block_until_ready(dice_loss(preds3, targets3))
    ref3 = _dice_loss_ref(preds3, targets3)
    assert jnp.allclose(loss3, ref3, atol=1e-5, rtol=1e-5), (loss3, ref3)

    print("KERNEL_OK")
</pallas_src>

<mosaic_0001>
module attributes {stable_mosaic.version = 11 : i64} {
  func.func @_dice_partials_kernel(%arg0: i32, %arg1: memref<16x128xf32, #tpu.memory_space<vmem>>, %arg2: memref<16x128xf32, #tpu.memory_space<vmem>>, %arg3: memref<1x128xf32, #tpu.memory_space<vmem>>, %arg4: memref<1x128xf32, #tpu.memory_space<vmem>>) attributes {dimension_semantics = [#tpu.dimension_semantics<arbitrary>], iteration_bounds = array<i64: 1>, scalar_prefetch = 0 : i64, scratch_operands = 0 : i64, tpu.core_type = #tpu.core_type<tc>, window_params = [{transform_indices = @transform_0, window_bounds = array<i64: 16, 128>}, {transform_indices = @transform_1, window_bounds = array<i64: 16, 128>}, {pipeline_mode = #tpu.pipeline_mode<synchronous>, transform_indices = @transform_2, window_bounds = array<i64: 1, 128>}, {pipeline_mode = #tpu.pipeline_mode<synchronous>, transform_indices = @transform_3, window_bounds = array<i64: 1, 128>}]} {
    %c0_i32 = arith.constant 0 : i32
    %0 = arith.cmpi eq, %arg0, %c0_i32 : i32
    %1 = arith.extui %0 : i1 to i32
    %c0_i32_0 = arith.constant 0 : i32
    %2 = arith.cmpi ne, %1, %c0_i32_0 : i32
    scf.if %2 {
      %cst_14 = arith.constant 0.000000e+00 : f32
      %22 = vector.broadcast %cst_14 : f32 to vector<1x128xf32>
      %c0_15 = arith.constant 0 : index
      %c0_16 = arith.constant 0 : index
      %23 = vector.load %arg3[%c0_15, %c0_16] : memref<1x128xf32, #tpu.memory_space<vmem>>, vector<1x128xf32>
      tpu.vector_store %arg3[%c0_15, %c0_16], %22 {strides = array<i32>} : memref<1x128xf32, #tpu.memory_space<vmem>>, vector<1x128xf32>,
      %cst_17 = arith.constant 0.000000e+00 : f32
      %24 = vector.broadcast %cst_17 : f32 to vector<1x128xf32>
      %c0_18 = arith.constant 0 : index
      %c0_19 = arith.constant 0 : index
      %25 = vector.load %arg4[%c0_18, %c0_19] : memref<1x128xf32, #tpu.memory_space<vmem>>, vector<1x128xf32>
      tpu.vector_store %arg4[%c0_18, %c0_19], %24 {strides = array<i32>} : memref<1x128xf32, #tpu.memory_space<vmem>>, vector<1x128xf32>,
    } else {
    }
    %c0 = arith.constant 0 : index
    %c0_1 = arith.constant 0 : index
    %3 = vector.load %arg1[%c0, %c0_1] : memref<16x128xf32, #tpu.memory_space<vmem>>, vector<16x128xf32>
    %4 = arith.negf %3 : vector<16x128xf32>
    %5 = math.exp %4 : vector<16x128xf32>
    %cst = arith.constant 1.000000e+00 : f32
    %6 = vector.broadcast %cst : f32 to vector<16x128xf32>
    %7 = arith.addf %6, %5 : vector<16x128xf32>
    %8 = arith.divf %6, %7 : vector<16x128xf32>
    %c0_2 = arith.constant 0 : index
    %c0_3 = arith.constant 0 : index
    %9 = vector.load %arg2[%c0_2, %c0_3] : memref<16x128xf32, #tpu.memory_space<vmem>>, vector<16x128xf32>
    %10 = arith.mulf %8, %9 : vector<16x128xf32>
    %11 = arith.addf %8, %9 : vector<16x128xf32>
    %c0_4 = arith.constant 0 : index
    %c0_5 = arith.constant 0 : index
    %12 = vector.load %arg3[%c0_4, %c0_5] : memref<1x128xf32, #tpu.memory_space<vmem>>, vector<1x128xf32>
    %cst_6 = arith.constant dense<0.000000e+00> : vector<128xf32>
    %13 = vector.multi_reduction <add>, %10, %cst_6 [0] : vector<16x128xf32> to vector<128xf32>
    %14 = vector.shape_cast %13 : vector<128xf32> to vector<1x128xf32>
    %15 = arith.addf %12, %14 : vector<1x128xf32>
    %c0_7 = arith.constant 0 : index
    %c0_8 = arith.constant 0 : index
    %16 = vector.load %arg3[%c0_7, %c0_8] : memref<1x128xf32, #tpu.memory_space<vmem>>, vector<1x128xf32>
    tpu.vector_store %arg3[%c0_7, %c0_8], %15 {strides = array<i32>} : memref<1x128xf32, #tpu.memory_space<vmem>>, vector<1x128xf32>,
    %c0_9 = arith.constant 0 : index
    %c0_10 = arith.constant 0 : index
    %17 = vector.load %arg4[%c0_9, %c0_10] : memref<1x128xf32, #tpu.memory_space<vmem>>, vector<1x128xf32>
    %cst_11 = arith.constant dense<0.000000e+00> : vector<128xf32>
    %18 = vector.multi_reduction <add>, %11, %cst_11 [0] : vector<16x128xf32> to vector<128xf32>
    %19 = vector.shape_cast %18 : vector<128xf32> to vector<1x128xf32>
    %20 = arith.addf %17, %19 : vector<1x128xf32>
    %c0_12 = arith.constant 0 : index
    %c0_13 = arith.constant 0 : index
    %21 = vector.load %arg4[%c0_12, %c0_13] : memref<1x128xf32, #tpu.memory_space<vmem>>, vector<1x128xf32>
    tpu.vector_store %arg4[%c0_12, %c0_13], %20 {strides = array<i32>} : memref<1x128xf32, #tpu.memory_space<vmem>>, vector<1x128xf32>,
    return
  }
  func.func @transform_0(%arg0: i32) -> (i32, i32) {
    %c0_i32 = arith.constant 0 : i32
    %c0_i32_0 = arith.constant 0 : i32
    return %arg0, %c0_i32 : i32, i32
  }
  func.func @transform_1(%arg0: i32) -> (i32, i32) {
    %c0_i32 = arith.constant 0 : i32
    %c0_i32_0 = arith.constant 0 : i32
    return %arg0, %c0_i32 : i32, i32
  }
  func.func @transform_2(%arg0: i32) -> (i32, i32) {
    %c0_i32 = arith.constant 0 : i32
    %c0_i32_0 = arith.constant 0 : i32
    %c0_i32_1 = arith.constant 0 : i32
    return %c0_i32, %c0_i32_0 : i32, i32
  }
  func.func @transform_3(%arg0: i32) -> (i32, i32) {
    %c0_i32 = arith.constant 0 : i32
    %c0_i32_0 = arith.constant 0 : i32
    %c0_i32_1 = arith.constant 0 : i32
    return %c0_i32, %c0_i32_0 : i32, i32
  }
}

</mosaic_0001>

<llo_original>
// kernel: tpu_custom_call.1
$region0: #{tpu_custom_call.1}
  #allocation0 [shape = 'u32[]', space=smem, size = 0x4, offset = 0x4, fixed_abs, tag = 'smem constant byte address 0x4 - core index']
  #allocation1 [shape = 'u32[72,128]{1,0:T(1,128)}', space=vmem, size = 0x9000, scoped, tag = 'internal scratch']
  %s0 = inlined_call_operand.hbm [shape: f32[16,128], index: 0, kind: input, shape index: {}]
  %s1 = inlined_call_operand.hbm [shape: f32[16,128], index: 1, kind: input, shape index: {}]
  %s2 = inlined_call_operand.hbm [shape: f32[1,128], index: 2, kind: output, shape index: {0}]
  %s3 = inlined_call_operand.hbm [shape: f32[1,128], index: 3, kind: output, shape index: {1}]
  %4 = xla_tuple %s2, %s3
  %s5 = sld [smem:[#allocation0]]
  $region38: #{tpu_custom_call.1} parent=0
    _
  %s7 = ssub.s32 1, %s5
  %s8 = scalar_select 0, %s7, %s5
  $region1: #{tpu_custom_call.1} parent=0
    #allocation2 [shape = 'u8[8192]{0}', space=vmem, size = 0x2000, scoped, tag = 'input window, operand 0, single buffered']
    #allocation3 [shape = 's32[1]{0}', space=sflag, size = 0x4, scoped, tag = 'scoped memory for tpu_custom_call.1']
    #allocation4 [shape = 's32[1]{0}', space=sflag, size = 0x4, scoped, tag = 'scoped memory for tpu_custom_call.1']
    #allocation5 [shape = 'u8[8192]{0}', space=vmem, size = 0x2000, scoped, tag = 'input window, operand 1, single buffered']
    #allocation6 [shape = 's32[1]{0}', space=sflag, size = 0x4, scoped, tag = 'scoped memory for tpu_custom_call.1']
    #allocation7 [shape = 'u8[512]{0}', space=vmem, size = 0x400, scoped, tag = 'output window, operand 0, single buffered']
    #allocation8 [shape = 'u8[512]{0}', space=vmem, size = 0x400, scoped, tag = 'output window, operand 1, single buffered']
    #allocation9 [shape = 's32[1]{0}', space=sflag, size = 0x4, scoped, tag = 'scoped memory for tpu_custom_call.1']
    %9 = vsyncpa [#allocation3], 0
    %10 = vsyncpa [#allocation6], 0
    %11 = vsyncpa [#allocation4], 0
    %12 = vsyncpa [#allocation9], 0
    // Predicated region
    $region2: #{tpu_custom_call.1} parent=1 // pred_check
      _
    $region3: #{tpu_custom_call.1} parent=1 // pred_check_branch
      %14 = sbr.rel (0) target = $region5
    $region4: #{tpu_custom_call.1} parent=1 // pred_region
      %16 = vsyncadd [#allocation3], 0
      %s17 = sshll.u32 %s0, 4
      %s18 = int_to_ptr.hbm [resolvable:$true] %s17
      %s19 = sshll.u32 [#allocation2], 4
      %s20 = int_to_ptr.vmem [resolvable:$true] %s19
      %25 = dma.hbm_to_vmem [thread:$0]  %s18, 256, %s20, [#allocation3], 128, 128, 8
    $region5: #{tpu_custom_call.1} parent=1 // pred_fallthru
      _
    // Predicated region
    $region6: #{tpu_custom_call.1} parent=1 // pred_check
      _
    $region7: #{tpu_custom_call.1} parent=1 // pred_check_branch
      %27 = sbr.rel (0) target = $region9
    $region8: #{tpu_custom_call.1} parent=1 // pred_region
      %29 = vsyncadd [#allocation6], 0
      %s30 = sshll.u32 %s1, 4
      %s31 = int_to_ptr.hbm [resolvable:$true] %s30
      %s32 = sshll.u32 [#allocation5], 4
      %s33 = int_to_ptr.vmem [resolvable:$true] %s32
      %38 = dma.hbm_to_vmem [thread:$0]  %s31, 256, %s33, [#allocation6], 128, 128, 8
    $region9: #{tpu_custom_call.1} parent=1 // pred_fallthru
      _
    // Predicated region
    $region10: #{tpu_custom_call.1} parent=1 // pred_check
      _
    $region11: #{tpu_custom_call.1} parent=1 // pred_check_branch
      %40 = sbr.rel (0) target = $region13
    $region12: #{tpu_custom_call.1} parent=1 // pred_region
      %42 = dma.done [#allocation3], 256
    $region13: #{tpu_custom_call.1} parent=1 // pred_fallthru
      _
    // Predicated region
    $region14: #{tpu_custom_call.1} parent=1 // pred_check
      _
    $region15: #{tpu_custom_call.1} parent=1 // pred_check_branch
      %44 = sbr.rel (0) target = $region17
    $region16: #{tpu_custom_call.1} parent=1 // pred_region
      %46 = dma.done [#allocation6], 256
    $region17: #{tpu_custom_call.1} parent=1 // pred_fallthru
      _
    %p47 = scmp.eq.s32.totalorder 0, 0
    // Predicated region
    $region18: #{tpu_custom_call.1} parent=1 // pred_check
      %p48 = pneg %p47
    $region19: #{tpu_custom_call.1} parent=1 // pred_check_branch
      %50 = sbr.rel (%p48) target = $region21
    $region20: #{tpu_custom_call.1} parent=1 // pred_region
      %51 = vst [vmem:[#allocation7] sm:$0x1] 0.0
      %52 = vst [vmem:[#allocation8] sm:$0x1] 0.0
    $region21: #{tpu_custom_call.1} parent=1 // pred_fallthru
      _
    %v53 = vld [vmem:[#allocation2] sm:$0xff]
    %v54 = vld [vmem:[#allocation2 + $0x8] sm:$0xff]
    %v55 = vxor.u32 %v53, 2147483648
    %v56 = vxor.u32 %v54, 2147483648
    %v57 = vmul.f32 %v55, 1.442695
    %v58 = vpow.pop %v57
    %v59 = vmul.f32 %v56, 1.442695
    %v60 = vpow.pop %v59
    %v61 = vadd.f32 %v58, 1.0
    %v62 = vadd.f32 %v60, 1.0
    %v63 = vrcp.pop %v61
    %v64 = vmul.f32 %v61, %v63
    %v65 = vsub.f32 1.0, %v64
    %v66 = vmul.f32 %v63, %v65
    %v67 = vadd.f32 %v63, %v66
    %vm68 = vweird.f32 %v61
    %vm69 = vweird.f32 %v63
    %vm70 = vmor %vm68, %vm69
    %v71 = vsel %vm70, %v63, %v67
    %v72 = vand.u32 2147483647, %v61
    %vm73 = vcmp.eq.f32.partialorder %v72, 8.507059e+37
    %v74 = vand.u32 %v61, 2147483648
    %v75 = vor.u32 1.1754944e-38, %v74
    %v76 = vsel %vm73, %v75, %v71
    %v77 = vmul.f32 1.0, %v76
    %v78 = vrcp.pop %v62
    %v79 = vmul.f32 %v62, %v78
    %v80 = vsub.f32 1.0, %v79
    %v81 = vmul.f32 %v78, %v80
    %v82 = vadd.f32 %v78, %v81
    %vm83 = vweird.f32 %v62
    %vm84 = vweird.f32 %v78
    %vm85 = vmor %vm83, %vm84
    %v86 = vsel %vm85, %v78, %v82
    %v87 = vand.u32 2147483647, %v62
    %vm88 = vcmp.eq.f32.partialorder %v87, 8.507059e+37
    %v89 = vand.u32 %v62, 2147483648
    %v90 = vor.u32 1.1754944e-38, %v89
    %v91 = vsel %vm88, %v90, %v86
    %v92 = vmul.f32 1.0, %v91
    %v93 = vld [vmem:[#allocation5] sm:$0xff]
    %v94 = vld [vmem:[#allocation5 + $0x8] sm:$0xff]
    %v95 = vmul.f32 %v77, %v93
    %v96 = vmul.f32 %v92, %v94
    %v97 = vadd.f32 %v77, %v93
    %v98 = vadd.f32 %v92, %v94
    %v99 = vld [vmem:[#allocation7] sm:$0x1]
    %v100 = vadd.f32 %v95, %v96
    %v101 = vrot.slane %v100, 4
    %v102 = vadd.f32 %v100, %v101
    %v103 = vrot.slane %v102, 2
    %v104 = vadd.f32 %v102, %v103
    %v105 = vrot.slane %v104, 1
    %v106 = vadd.f32 %v104, %v105
    %v107 = vadd.f32 %v99, %v106
    %108 = vst [vmem:[#allocation7] sm:$0x1] %v107
    %v109 = vld [vmem:[#allocation8] sm:$0x1]
    %v110 = vadd.f32 %v97, %v98
    %v111 = vrot.slane %v110, 4
    %v112 = vadd.f32 %v110, %v111
    %v113 = vrot.slane %v112, 2
    %v114 = vadd.f32 %v112, %v113
    %v115 = vrot.slane %v114, 1
    %v116 = vadd.f32 %v114, %v115
    %v117 = vadd.f32 %v109, %v116
    %118 = vst [vmem:[#allocation8] sm:$0x1] %v117
    // Predicated region
    $region22: #{tpu_custom_call.1} parent=1 // pred_check
      _
    $region23: #{tpu_custom_call.1} parent=1 // pred_check_branch
      %120 = sbr.rel (0) target = $region25
    $region24: #{tpu_custom_call.1} parent=1 // pred_region
      %122 = vsyncadd [#allocation4], 0
      %s124 = sshll.u32 [#allocation7], 4
      %s125 = int_to_ptr.vmem [resolvable:$true] %s124
      %s126 = sshll.u32 %s2, 4
      %s127 = int_to_ptr.hbm [resolvable:$true] %s126
      %129 = dma.vmem_to_hbm [thread:$0]  %s125, 16, %s127, [#allocation4]
    $region25: #{tpu_custom_call.1} parent=1 // pred_fallthru
      _
    // Predicated region
    $region26: #{tpu_custom_call.1} parent=1 // pred_check
      _
    $region27: #{tpu_custom_call.1} parent=1 // pred_check_branch
      %131 = sbr.rel (0) target = $region29
    $region28: #{tpu_custom_call.1} parent=1 // pred_region
      %133 = vsyncadd [#allocation9], 0
      %s135 = sshll.u32 [#allocation8], 4
      %s136 = int_to_ptr.vmem [resolvable:$true] %s135
      %s137 = sshll.u32 %s3, 4
      %s138 = int_to_ptr.hbm [resolvable:$true] %s137
      %140 = dma.vmem_to_hbm [thread:$0]  %s136, 16, %s138, [#allocation9]
    $region29: #{tpu_custom_call.1} parent=1 // pred_fallthru
      _
    // Predicated region
    $region30: #{tpu_custom_call.1} parent=1 // pred_check
      _
    $region31: #{tpu_custom_call.1} parent=1 // pred_check_branch
      %142 = sbr.rel (0) target = $region33
    $region32: #{tpu_custom_call.1} parent=1 // pred_region
      %144 = dma.done [#allocation4], 16
    $region33: #{tpu_custom_call.1} parent=1 // pred_fallthru
      _
    // Predicated region
    $region34: #{tpu_custom_call.1} parent=1 // pred_check
      _
    $region35: #{tpu_custom_call.1} parent=1 // pred_check_branch
      %146 = sbr.rel (0) target = $region37
    $region36: #{tpu_custom_call.1} parent=1 // pred_region
      %148 = dma.done [#allocation9], 16
    $region37: #{tpu_custom_call.1} parent=1 // pred_fallthru
      _
    %149 = vsyncpa [#allocation3], 1
    %150 = vsyncpa [#allocation6], 1
    %151 = vsyncpa [#allocation4], 1
    %152 = vsyncpa [#allocation9], 1

</llo_original>
